<compile_context>
chip_gen: v5e
topology: v5e:2x2
jax: 0.10.0
libtpu: 0.0.40
codegen_flags: <defaults>
</compile_context>

<pallas_src>
import functools

import jax
import jax.numpy as jnp
from jax.experimental import pallas as pl
from jax.experimental.pallas import tpu as pltpu


def _channel_attention_kernel(x_ref, w1_ref, w2_ref, o_ref,
                              sum_ref, max_ref, *, hw_true, thw, needs_mask):
    # x_ref : (TB, C, THW)  tile of TB batch rows, THW spatial positions
    # w1_ref: (C, Cr)       fc1 weight (right-multiply form)
    # w2_ref: (Cr, C)       fc2 weight (right-multiply form)
    # o_ref : (TB, C)       sigmoid attention (written on last HW step)
    # sum_ref/max_ref: (TB, C) f32 running accumulators (VMEM scratch)
    hw = pl.program_id(1)
    n_hw = pl.num_programs(1)

    @pl.when(hw == 0)
    def _init():
        sum_ref[...] = jnp.zeros_like(sum_ref)
        max_ref[...] = jnp.full_like(max_ref, -jnp.inf)

    xb = x_ref[...].astype(jnp.float32)                       # (TB, C, THW)

    if needs_mask:
        # Boundary tile contains lanes past the true H*W: neutralize per-branch.
        lane = jax.lax.broadcasted_iota(jnp.int32, xb.shape, dimension=2)
        valid = (hw * thw + lane) < hw_true
        xb_sum = jnp.where(valid, xb, 0.0)
        xb_max = jnp.where(valid, xb, -jnp.inf)
    else:
        xb_sum = xb
        xb_max = xb

    # Running reductions over the spatial (lane) axis.
    sum_ref[...] = sum_ref[...] + jnp.sum(xb_sum, axis=2)     # (TB, C)
    max_ref[...] = jnp.maximum(max_ref[...], jnp.max(xb_max, axis=2))

    @pl.when(hw == n_hw - 1)
    def _finalize():
        tb = sum_ref.shape[0]
        avg_p = sum_ref[...] * (1.0 / float(hw_true))          # (TB, C)
        # Stack avg & max pooled vectors -> one fc1 matmul (2*TB, C) x (C, Cr).
        pooled = jnp.concatenate([avg_p, max_ref[...]], axis=0)
        h = jnp.maximum(
            jnp.dot(pooled, w1_ref[...], preferred_element_type=jnp.float32),
            0.0)                                               # (2*TB, Cr)
        # fc2 distributes over the sum -> fuse the two fc2 matmuls into one.
        fused = h[:tb] + h[tb:]                                # (TB, Cr)
        logits = jnp.dot(fused, w2_ref[...],
                         preferred_element_type=jnp.float32)   # (TB, C)
        o_ref[...] = jax.nn.sigmoid(logits).astype(o_ref.dtype)


def channel_attention(x, w_fc1, w_fc2, *, tb=8,
                      x_stream_vmem_bytes=8 * 1024 * 1024):
    """x: (N, C, H, W) NCHW.
    w_fc1: (C_r, C)  -- PyTorch Conv2d(C, C_r, 1, bias=False).weight squeezed.
    w_fc2: (C, C_r)  -- PyTorch Conv2d(C_r, C, 1, bias=False).weight squeezed.
    Returns sigmoid channel attention of shape (N, C, 1, 1)."""
    N, C, H, W = x.shape
    HW = H * W
    Cr = w_fc1.shape[0]
    assert w_fc1.shape == (Cr, C) and w_fc2.shape == (C, Cr)

    # Batch tile: whole batch if tiny, otherwise sublane-aligned chunks of 8.
    tb_tile = N if N < 8 else max(8, (min(tb, N) // 8) * 8)
    n_b = pl.cdiv(N, tb_tile)
    n_pad = n_b * tb_tile          # output rows allocated -> writes in-bounds

    # Spatial tile: as many 128-lane groups as fit the double-buffered budget,
    # capped at the lane-rounded full spatial extent.
    itemsize = x.dtype.itemsize
    hw_round = pl.cdiv(HW, 128) * 128
    lanes_fit = x_stream_vmem_bytes // (2 * tb_tile * C * itemsize)
    thw_tile = int(min(hw_round, max(128, (lanes_fit // 128) * 128)))
    n_hw = pl.cdiv(HW, thw_tile)
    needs_mask = (HW % thw_tile) != 0

    # No HBM padding copy: boundary blocks are masked in-kernel.
    x_flat = x.reshape(N, C, HW)

    # Kernel consumes weights as right-multiply matrices.
    w1 = w_fc1.T                                               # (C, Cr)
    w2 = w_fc2.T                                               # (Cr, C)

    kernel = functools.partial(_channel_attention_kernel,
                               hw_true=HW, thw=thw_tile, needs_mask=needs_mask)

    cost = pl.CostEstimate(
        flops=int(2 * N * C * HW + 2 * (2 * N) * C * Cr + 2 * N * Cr * C),
        transcendentals=int(N * C),
        bytes_accessed=int(x_flat.size * itemsize
                           + (w1.size + w2.size) * w1.dtype.itemsize
                           + N * C * itemsize))

    out = pl.pallas_call(
        kernel,
        out_shape=jax.ShapeDtypeStruct((n_pad, C), x.dtype),
        grid_spec=pltpu.PrefetchScalarGridSpec(
            num_scalar_prefetch=0,
            grid=(n_b, n_hw),
            in_specs=[
                # x streamed tile-by-tile along HW (double-buffered by Pallas).
                pl.BlockSpec((tb_tile, C, thw_tile), lambda b, hw: (b, 0, hw)),
                # Weights stay resident across the HW reduction axis.
                pl.BlockSpec((C, Cr), lambda b, hw: (0, 0)),
                pl.BlockSpec((Cr, C), lambda b, hw: (0, 0)),
            ],
            out_specs=pl.BlockSpec((tb_tile, C), lambda b, hw: (b, 0)),
            scratch_shapes=[
                pltpu.VMEM((tb_tile, C), jnp.float32),   # running sum
                pltpu.VMEM((tb_tile, C), jnp.float32),   # running max
            ],
        ),
        compiler_params=pltpu.CompilerParams(
            dimension_semantics=("parallel", "arbitrary")),
        cost_estimate=cost,
    )(x_flat, w1, w2)

    return out[:N].reshape(N, C, 1, 1)


def _reference(x, w_fc1, w_fc2):
    avg_p = jnp.mean(x, axis=(2, 3))                           # (N, C)
    max_p = jnp.max(x, axis=(2, 3))                            # (N, C)
    out = (jnp.maximum(avg_p @ w_fc1.T, 0.0) @ w_fc2.T
           + jnp.maximum(max_p @ w_fc1.T, 0.0) @ w_fc2.T)
    return jax.nn.sigmoid(out).reshape(x.shape[0], x.shape[1], 1, 1)


if __name__ == "__main__":
    key = jax.random.PRNGKey(0)

    # (N, C, H, W, ratio, x_stream_vmem_bytes) -- exercises: aligned single
    # tile, masked boundary tile, and multi-step HW reduction + batch tiling.
    cases = [
        (2, 32, 16, 16, 8, 8 * 1024 * 1024),
        (3, 32, 10, 10, 8, 8 * 1024 * 1024),
        (9, 16, 32, 32, 8, 128 * 1024),
    ]

    for (N, C, H, W, ratio, budget) in cases:
        Cr = C // ratio
        key, kx, k1, k2 = jax.random.split(key, 4)
        x = jax.random.normal(kx, (N, C, H, W), dtype=jnp.float32)
        # Deterministic synthetic weights (Conv2d(..., 1, bias=False) shapes).
        w_fc1 = jax.random.normal(k1, (Cr, C), dtype=jnp.float32) * (1.0 / C) ** 0.5
        w_fc2 = jax.random.normal(k2, (C, Cr), dtype=jnp.float32) * (1.0 / Cr) ** 0.5

        out = channel_attention(x, w_fc1, w_fc2, x_stream_vmem_bytes=budget)
        jax.block_until_ready(out)

        ref = _reference(x, w_fc1, w_fc2)
        assert jnp.allclose(out, ref, atol=1e-5, rtol=1e-5), \
            f"mismatch vs reference for case {(N, C, H, W)}"

    print("KERNEL_OK")
</pallas_src>

<mosaic_0001>
module attributes {stable_mosaic.version = 11 : i64} {
  func.func @_channel_attention_kernel(%arg0: i32, %arg1: i32, %arg2: memref<2x32x256xf32, #tpu.memory_space<vmem>>, %arg3: memref<32x4xf32, #tpu.memory_space<vmem>>, %arg4: memref<4x32xf32, #tpu.memory_space<vmem>>, %arg5: memref<2x32xf32, #tpu.memory_space<vmem>>, %arg6: memref<2x32xf32, #tpu.memory_space<vmem>>, %arg7: memref<2x32xf32, #tpu.memory_space<vmem>>) attributes {dimension_semantics = [#tpu.dimension_semantics<parallel>, #tpu.dimension_semantics<arbitrary>], iteration_bounds = array<i64: 1, 1>, scalar_prefetch = 0 : i64, scratch_operands = 2 : i64, tpu.core_type = #tpu.core_type<tc>, window_params = [{transform_indices = @transform_0, window_bounds = array<i64: 2, 32, 256>}, {pipeline_mode = #tpu.pipeline_mode<synchronous>, transform_indices = @transform_1, window_bounds = array<i64: 32, 4>}, {pipeline_mode = #tpu.pipeline_mode<synchronous>, transform_indices = @transform_2, window_bounds = array<i64: 4, 32>}, {transform_indices = @transform_3, window_bounds = array<i64: 2, 32>}]} {
    %c0_i32 = arith.constant 0 : i32
    %0 = arith.cmpi eq, %arg1, %c0_i32 : i32
    %1 = arith.extui %0 : i1 to i32
    %c0_i32_0 = arith.constant 0 : i32
    %2 = arith.cmpi ne, %1, %c0_i32_0 : i32
    scf.if %2 {
      %cst_14 = arith.constant 0.000000e+00 : f32
      %15 = vector.broadcast %cst_14 : f32 to vector<2x32xf32>
      %c0_15 = arith.constant 0 : index
      %c0_16 = arith.constant 0 : index
      %16 = vector.load %arg6[%c0_15, %c0_16] : memref<2x32xf32, #tpu.memory_space<vmem>>, vector<2x32xf32>
      tpu.vector_store %arg6[%c0_15, %c0_16], %15 {strides = array<i32>} : memref<2x32xf32, #tpu.memory_space<vmem>>, vector<2x32xf32>,
      %cst_17 = arith.constant 0xFF800000 : f32
      %17 = vector.broadcast %cst_17 : f32 to vector<2x32xf32>
      %c0_18 = arith.constant 0 : index
      %c0_19 = arith.constant 0 : index
      %18 = vector.load %arg7[%c0_18, %c0_19] : memref<2x32xf32, #tpu.memory_space<vmem>>, vector<2x32xf32>
      tpu.vector_store %arg7[%c0_18, %c0_19], %17 {strides = array<i32>} : memref<2x32xf32, #tpu.memory_space<vmem>>, vector<2x32xf32>,
    } else {
    }
    %c0 = arith.constant 0 : index
    %c0_1 = arith.constant 0 : index
    %c0_2 = arith.constant 0 : index
    %3 = vector.load %arg2[%c0, %c0_1, %c0_2] : memref<2x32x256xf32, #tpu.memory_space<vmem>>, vector<2x32x256xf32>
    %c0_3 = arith.constant 0 : index
    %c0_4 = arith.constant 0 : index
    %4 = vector.load %arg6[%c0_3, %c0_4] : memref<2x32xf32, #tpu.memory_space<vmem>>, vector<2x32xf32>
    %cst = arith.constant dense<0.000000e+00> : vector<2x32xf32>
    %5 = vector.multi_reduction <add>, %3, %cst [2] : vector<2x32x256xf32> to vector<2x32xf32>
    %6 = arith.addf %4, %5 : vector<2x32xf32>
    %c0_5 = arith.constant 0 : index
    %c0_6 = arith.constant 0 : index
    %7 = vector.load %arg6[%c0_5, %c0_6] : memref<2x32xf32, #tpu.memory_space<vmem>>, vector<2x32xf32>
    tpu.vector_store %arg6[%c0_5, %c0_6], %6 {strides = array<i32>} : memref<2x32xf32, #tpu.memory_space<vmem>>, vector<2x32xf32>,
    %c0_7 = arith.constant 0 : index
    %c0_8 = arith.constant 0 : index
    %8 = vector.load %arg7[%c0_7, %c0_8] : memref<2x32xf32, #tpu.memory_space<vmem>>, vector<2x32xf32>
    %cst_9 = arith.constant dense<0xFF800000> : vector<2x32xf32>
    %9 = vector.multi_reduction <maximumf>, %3, %cst_9 [2] : vector<2x32x256xf32> to vector<2x32xf32>
    %10 = arith.maximumf %8, %9 : vector<2x32xf32>
    %c0_10 = arith.constant 0 : index
    %c0_11 = arith.constant 0 : index
    %11 = vector.load %arg7[%c0_10, %c0_11] : memref<2x32xf32, #tpu.memory_space<vmem>>, vector<2x32xf32>
    tpu.vector_store %arg7[%c0_10, %c0_11], %10 {strides = array<i32>} : memref<2x32xf32, #tpu.memory_space<vmem>>, vector<2x32xf32>,
    %c0_i32_12 = arith.constant 0 : i32
    %12 = arith.cmpi eq, %arg1, %c0_i32_12 : i32
    %13 = arith.extui %12 : i1 to i32
    %c0_i32_13 = arith.constant 0 : i32
    %14 = arith.cmpi ne, %13, %c0_i32_13 : i32
    scf.if %14 {
      %c0_14 = arith.constant 0 : index
      %c0_15 = arith.constant 0 : index
      %15 = vector.load %arg6[%c0_14, %c0_15] : memref<2x32xf32, #tpu.memory_space<vmem>>, vector<2x32xf32>
      %cst_16 = arith.constant 3.906250e-03 : f32
      %16 = vector.broadcast %cst_16 : f32 to vector<2x32xf32>
      %17 = arith.mulf %15, %16 : vector<2x32xf32>
      %c0_17 = arith.constant 0 : index
      %c0_18 = arith.constant 0 : index
      %18 = vector.load %arg7[%c0_17, %c0_18] : memref<2x32xf32, #tpu.memory_space<vmem>>, vector<2x32xf32>
      %19 = tpu.concatenate %17, %18 in 0 : vector<2x32xf32>, vector<2x32xf32> -> vector<4x32xf32>
      %c0_19 = arith.constant 0 : index
      %c0_20 = arith.constant 0 : index
      %20 = vector.load %arg3[%c0_19, %c0_20] : memref<32x4xf32, #tpu.memory_space<vmem>>, vector<32x4xf32>
      %cst_21 = arith.constant dense<0.000000e+00> : vector<4x4xf32>
      %21 = tpu.matmul %19, %20, %cst_21 {dimension_numbers = #tpu.dot_dimension_numbers<[1], [0], [0], [1], [0, 0, 1, 1], [], []>} : vector<4x32xf32>, vector<32x4xf32>, vector<4x4xf32> -> vector<4x4xf32>
      %cst_22 = arith.constant 0.000000e+00 : f32
      %22 = vector.broadcast %cst_22 : f32 to vector<4x4xf32>
      %23 = arith.maximumf %21, %22 : vector<4x4xf32>
      %24 = vector.extract_strided_slice %23 {offsets = [0, 0], sizes = [2, 4], strides = [1, 1]} : vector<4x4xf32> to vector<2x4xf32>
      %25 = vector.extract_strided_slice %23 {offsets = [2, 0], sizes = [2, 4], strides = [1, 1]} : vector<4x4xf32> to vector<2x4xf32>
      %26 = arith.addf %24, %25 : vector<2x4xf32>
      %c0_23 = arith.constant 0 : index
      %c0_24 = arith.constant 0 : index
      %27 = vector.load %arg4[%c0_23, %c0_24] : memref<4x32xf32, #tpu.memory_space<vmem>>, vector<4x32xf32>
      %cst_25 = arith.constant dense<0.000000e+00> : vector<2x32xf32>
      %28 = tpu.matmul %26, %27, %cst_25 {dimension_numbers = #tpu.dot_dimension_numbers<[1], [0], [0], [1], [0, 0, 1, 1], [], []>} : vector<2x4xf32>, vector<4x32xf32>, vector<2x32xf32> -> vector<2x32xf32>
      %29 = arith.negf %28 : vector<2x32xf32>
      %30 = math.exp %29 : vector<2x32xf32>
      %cst_26 = arith.constant 1.000000e+00 : f32
      %31 = vector.broadcast %cst_26 : f32 to vector<2x32xf32>
      %32 = arith.addf %31, %30 : vector<2x32xf32>
      %33 = arith.divf %31, %32 : vector<2x32xf32>
      %c0_27 = arith.constant 0 : index
      %c0_28 = arith.constant 0 : index
      %34 = vector.load %arg5[%c0_27, %c0_28] : memref<2x32xf32, #tpu.memory_space<vmem>>, vector<2x32xf32>
      tpu.vector_store %arg5[%c0_27, %c0_28], %33 {strides = array<i32>} : memref<2x32xf32, #tpu.memory_space<vmem>>, vector<2x32xf32>,
    } else {
    }
    return
  }
  func.func @transform_0(%arg0: i32, %arg1: i32) -> (i32, i32, i32) {
    %c0_i32 = arith.constant 0 : i32
    %c0_i32_0 = arith.constant 0 : i32
    return %arg0, %c0_i32, %arg1 : i32, i32, i32
  }
  func.func @transform_1(%arg0: i32, %arg1: i32) -> (i32, i32) {
    %c0_i32 = arith.constant 0 : i32
    %c0_i32_0 = arith.constant 0 : i32
    %c0_i32_1 = arith.constant 0 : i32
    return %c0_i32, %c0_i32_0 : i32, i32
  }
  func.func @transform_2(%arg0: i32, %arg1: i32) -> (i32, i32) {
    %c0_i32 = arith.constant 0 : i32
    %c0_i32_0 = arith.constant 0 : i32
    %c0_i32_1 = arith.constant 0 : i32
    return %c0_i32, %c0_i32_0 : i32, i32
  }
  func.func @transform_3(%arg0: i32, %arg1: i32) -> (i32, i32) {
    %c0_i32 = arith.constant 0 : i32
    %c0_i32_0 = arith.constant 0 : i32
    return %arg0, %c0_i32 : i32, i32
  }
}

</mosaic_0001>

<llo_original>
// kernel: tpu_custom_call.1
$region0: #{tpu_custom_call.1}
  #allocation0 [shape = 'u32[]', space=smem, size = 0x4, offset = 0x4, fixed_abs, tag = 'smem constant byte address 0x4 - core index']
  #allocation1 [shape = 'u32[72,128]{1,0:T(1,128)}', space=vmem, size = 0x9000, scoped, tag = 'internal scratch']
  #allocation2 [shape = 'f32[2,32]{1,0:T(2,128)}', space=vmem, size = 0x400, scoped, tag = 'scratch operand']
  #allocation3 [shape = 'f32[2,32]{1,0:T(2,128)}', space=vmem, size = 0x400, scoped, tag = 'scratch operand']
  %s0 = inlined_call_operand.hbm [shape: f32[2,32,256], index: 0, kind: input, shape index: {}]
  %s1 = inlined_call_operand.vmem [shape: f32[32,4], index: 1, kind: input, shape index: {}]
  %s2 = inlined_call_operand.vmem [shape: f32[4,32], index: 2, kind: input, shape index: {}]
  %s3 = inlined_call_operand.hbm [shape: f32[2,32], index: 3, kind: output, shape index: {}]
  %s4 = sld [smem:[#allocation0]]
  $region34: #{tpu_custom_call.1} parent=0
    _
  %s6 = ssub.s32 1, %s4
  %s7 = scalar_select 0, %s6, %s4
  $region1: #{tpu_custom_call.1} parent=0
    #allocation4 [shape = 'u8[65536]{0}', space=vmem, size = 0x10000, scoped, tag = 'input window, operand 0, single buffered']
    #allocation5 [shape = 's32[1]{0}', space=sflag, size = 0x4, scoped, tag = 'scoped memory for tpu_custom_call.1']
    #allocation6 [shape = 's32[1]{0}', space=sflag, size = 0x4, scoped, tag = 'scoped memory for tpu_custom_call.1']
    #allocation7 [shape = 'u8[1024]{0}', space=vmem, size = 0x400, scoped, tag = 'output window, operand 0, single buffered']
    %8 = vsyncpa [#allocation5], 0
    %9 = vsyncpa [#allocation6], 0
    // Predicated region
    $region2: #{tpu_custom_call.1} parent=1 // pred_check
      _
    $region3: #{tpu_custom_call.1} parent=1 // pred_check_branch
      %11 = sbr.rel (0) target = $region5
    $region4: #{tpu_custom_call.1} parent=1 // pred_region
      %13 = vsyncadd [#allocation5], 0
      %s14 = sshll.u32 %s0, 4
      %s15 = int_to_ptr.hbm [resolvable:$true] %s14
      %s16 = sshll.u32 [#allocation4], 4
      %s17 = int_to_ptr.vmem [resolvable:$true] %s16
      %22 = dma.hbm_to_vmem [thread:$0]  %s15, 2048, %s17, [#allocation5], 256, 256, 16
    $region5: #{tpu_custom_call.1} parent=1 // pred_fallthru
      _
    // Predicated region
    $region6: #{tpu_custom_call.1} parent=1 // pred_check
      _
    $region7: #{tpu_custom_call.1} parent=1 // pred_check_branch
      %24 = sbr.rel (0) target = $region9
    $region8: #{tpu_custom_call.1} parent=1 // pred_region
      _
    $region9: #{tpu_custom_call.1} parent=1 // pred_fallthru
      _
    // Predicated region
    $region10: #{tpu_custom_call.1} parent=1 // pred_check
      _
    $region11: #{tpu_custom_call.1} parent=1 // pred_check_branch
      %26 = sbr.rel (0) target = $region13
    $region12: #{tpu_custom_call.1} parent=1 // pred_region
      _
    $region13: #{tpu_custom_call.1} parent=1 // pred_fallthru
      _
    // Predicated region
    $region14: #{tpu_custom_call.1} parent=1 // pred_check
      _
    $region15: #{tpu_custom_call.1} parent=1 // pred_check_branch
      %28 = sbr.rel (0) target = $region17
    $region16: #{tpu_custom_call.1} parent=1 // pred_region
      %30 = dma.done [#allocation5], 2048
    $region17: #{tpu_custom_call.1} parent=1 // pred_fallthru
      _
    %p31 = scmp.eq.s32.totalorder 0, 0
    // Predicated region
    $region18: #{tpu_custom_call.1} parent=1 // pred_check
      %p32 = pneg %p31
    $region19: #{tpu_custom_call.1} parent=1 // pred_check_branch
      %34 = sbr.rel (%p32) target = $region21
    $region20: #{tpu_custom_call.1} parent=1 // pred_region
      %vm35 = vcmask 254976
      %36 = vst.msk [vmem:[#allocation2] sm:$0x3] %vm35, 0.0
      %37 = vst.msk [vmem:[#allocation3] sm:$0x3] %vm35, -inf
    $region21: #{tpu_custom_call.1} parent=1 // pred_fallthru
      _
    %v38 = vld [vmem:[#allocation4] sm:$0xff]
    %v39 = vld [vmem:[#allocation4 + $0x8] sm:$0xff]
    %v40 = vld [vmem:[#allocation4 + $0x10] sm:$0xff]
    %v41 = vld [vmem:[#allocation4 + $0x18] sm:$0xff]
    %v42 = vld [vmem:[#allocation4 + $0x20] sm:$0xff]
    %v43 = vld [vmem:[#allocation4 + $0x28] sm:$0xff]
    %v44 = vld [vmem:[#allocation4 + $0x30] sm:$0xff]
    %v45 = vld [vmem:[#allocation4 + $0x38] sm:$0xff]
    %v46 = vld [vmem:[#allocation4 + $0x40] sm:$0xff]
    %v47 = vld [vmem:[#allocation4 + $0x48] sm:$0xff]
    %v48 = vld [vmem:[#allocation4 + $0x50] sm:$0xff]
    %v49 = vld [vmem:[#allocation4 + $0x58] sm:$0xff]
    %v50 = vld [vmem:[#allocation4 + $0x60] sm:$0xff]
    %v51 = vld [vmem:[#allocation4 + $0x68] sm:$0xff]
    %v52 = vld [vmem:[#allocation4 + $0x70] sm:$0xff]
    %v53 = vld [vmem:[#allocation4 + $0x78] sm:$0xff]
    %v54 = vld [vmem:[#allocation2] sm:$0x3]
    %v55 = vadd.f32 %v38, %v39
    %56 = vadd.xlane.f32.xlu0 %v55
    %v57 = vpop.xlane.xlu0 %56
    %v58 = vadd.f32 %v40, %v41
    %59 = vadd.xlane.f32.xlu0 %v58
    %v60 = vpop.xlane.xlu0 %59
    %v61 = vadd.f32 %v42, %v43
    %62 = vadd.xlane.f32.xlu0 %v61
    %v63 = vpop.xlane.xlu0 %62
    %v64 = vadd.f32 %v44, %v45
    %65 = vadd.xlane.f32.xlu0 %v64
    %v66 = vpop.xlane.xlu0 %65
    %v67 = vadd.f32 %v46, %v47
    %68 = vadd.xlane.f32.xlu0 %v67
    %v69 = vpop.xlane.xlu0 %68
    %v70 = vadd.f32 %v48, %v49
    %71 = vadd.xlane.f32.xlu0 %v70
    %v72 = vpop.xlane.xlu0 %71
    %v73 = vadd.f32 %v50, %v51
    %74 = vadd.xlane.f32.xlu0 %v73
    %v75 = vpop.xlane.xlu0 %74
    %v76 = vadd.f32 %v52, %v53
    %77 = vadd.xlane.f32.xlu0 %v76
    %v78 = vpop.xlane.xlu0 %77
    %v87 = vlaneseq
    %v88 = vand.u32 %v87, 127
    %v89 = vperm.slane %v57, %v88
    %v90 = vadd.s32 %v88, 4294967288
    %v91 = vperm.slane %v60, %v90
    %vm92 = vcmask 130112
    %v93 = vsel %vm92, %v91, %v89
    %v94 = vadd.s32 %v88, 4294967280
    %v95 = vperm.slane %v63, %v94
    %vm96 = vcmask 195712
    %v97 = vsel %vm96, %v95, %v93
    %v98 = vadd.s32 %v88, 4294967272
    %v99 = vperm.slane %v66, %v98
    %vm100 = vcmask 261312
    %v101 = vsel %vm100, %v99, %v97
    %v102 = vperm.slane %v69, %v88
    %v103 = vperm.slane %v72, %v90
    %v104 = vsel %vm92, %v103, %v102
    %v105 = vperm.slane %v75, %v94
    %v106 = vsel %vm96, %v105, %v104
    %v107 = vperm.slane %v78, %v98
    %v108 = vsel %vm100, %v107, %v106
    %vm109 = vcmask 1041409
    %v110 = vsel %vm109, %v108, %v101
    %v112 = vadd.f32 %v54, %v110
    %vm113 = vcmask 254976
    %114 = vst.msk [vmem:[#allocation2] sm:$0x3] %vm113, %v112
    %v115 = vld [vmem:[#allocation3] sm:$0x3]
    %v116 = vmax.f32 %v38, %v39
    %117 = vmax.xlane.f32.xlu0 %v116
    %v118 = vpop.xlane.xlu0 %117
    %v119 = vmax.f32 %v40, %v41
    %120 = vmax.xlane.f32.xlu0 %v119
    %v121 = vpop.xlane.xlu0 %120
    %v122 = vmax.f32 %v42, %v43
    %123 = vmax.xlane.f32.xlu0 %v122
    %v124 = vpop.xlane.xlu0 %123
    %v125 = vmax.f32 %v44, %v45
    %126 = vmax.xlane.f32.xlu0 %v125
    %v127 = vpop.xlane.xlu0 %126
    %v128 = vmax.f32 %v46, %v47
    %129 = vmax.xlane.f32.xlu0 %v128
    %v130 = vpop.xlane.xlu0 %129
    %v131 = vmax.f32 %v48, %v49
    %132 = vmax.xlane.f32.xlu0 %v131
    %v133 = vpop.xlane.xlu0 %132
    %v134 = vmax.f32 %v50, %v51
    %135 = vmax.xlane.f32.xlu0 %v134
    %v136 = vpop.xlane.xlu0 %135
    %v137 = vmax.f32 %v52, %v53
    %138 = vmax.xlane.f32.xlu0 %v137
    %v139 = vpop.xlane.xlu0 %138
    %v148 = vperm.slane %v118, %v88
    %v149 = vperm.slane %v121, %v90
    %v150 = vsel %vm92, %v149, %v148
    %v151 = vperm.slane %v124, %v94
    %v152 = vsel %vm96, %v151, %v150
    %v153 = vperm.slane %v127, %v98
    %v154 = vsel %vm100, %v153, %v152
    %v155 = vperm.slane %v130, %v88
    %v156 = vperm.slane %v133, %v90
    %v157 = vsel %vm92, %v156, %v155
    %v158 = vperm.slane %v136, %v94
    %v159 = vsel %vm96, %v158, %v157
    %v160 = vperm.slane %v139, %v98
    %v161 = vsel %vm100, %v160, %v159
    %v162 = vsel %vm109, %v161, %v154
    %v164 = vmax.f32 %v115, %v162
    %165 = vst.msk [vmem:[#allocation3] sm:$0x3] %vm113, %v164
    // Predicated region
    $region22: #{tpu_custom_call.1} parent=1 // pred_check
      %p166 = pneg %p31
    $region23: #{tpu_custom_call.1} parent=1 // pred_check_branch
      %168 = sbr.rel (%p166) target = $region25
    $region24: #{tpu_custom_call.1} parent=1 // pred_region
      %v169 = vld [vmem:[#allocation2] sm:$0x3]
      %v170 = vmul.f32 %v169, 0.00390625
      %v171 = vld [vmem:[#allocation3] sm:$0x3]
      %v173 = vrot.slane %v171, 6
      %vm175 = vcmask 1041408
      %v176 = vsel %vm175, %v170, %v173
      %v177 = vld [vmem:[%s1] sm:$0xff]
      %v178 = vld [vmem:[%s1 + $0x8] sm:$0xff]
      %v179 = vld [vmem:[%s1 + $0x10] sm:$0xff]
      %v180 = vld [vmem:[%s1 + $0x18] sm:$0xff]
      %vm181 = vcmask 261120
      %v183 = vsel %vm181, %v176, 0
      %185 = vmatpush.msra.mxu0 0.0
      %186 = vmatpush.msra.mxu0 0.0
      %187 = vmatpush.msra.mxu0 0.0
      %188 = vmatpush.msra.mxu0 0.0
      %189 = vmatpush.msra.mxu0 0.0
      %190 = vmatpush.msra.mxu0 0.0
      %191 = vmatpush.msra.mxu0 0.0
      %192 = vmatpush.msra.mxu0 0.0
      %193 = vmatpush.msra.mxu0 0.0
      %194 = vmatpush.msra.mxu0 0.0
      %195 = vmatpush.msra.mxu0 0.0
      %196 = vmatpush.msra.mxu0 0.0
      %197 = vmatpush.msra.mxu0 %v180
      %198 = vmatpush.msra.mxu0 %v179
      %199 = vmatpush.msra.mxu0 %v178
      %200 = vmatpush.msra.mxu0 %v177
      %201 = vmatmul.f32.gmra.mxu0 %v183
      %v202 = vpop.f32.mrf.mxu0
      %v203 = vadd.f32 0.0, %v202
      %204 = vdwg.mxu0
      %v205 = vmax.f32 %v203, 0.0
      %v207 = vrot.slane %v205, 2
      %v209 = vadd.f32 %v205, %v207
      %v210 = vld [vmem:[%s2] sm:$0xf]
      %vm211 = vcmask 31744
      %v213 = vsel %vm211, %v209, 0
      %vm215 = vcmask 1043456
      %v217 = vsel %vm215, %v210, 0
      %219 = vmatpush.msra.mxu0 0.0
      %220 = vmatpush.msra.mxu0 0.0
      %221 = vmatpush.msra.mxu0 0.0
      %222 = vmatpush.msra.mxu0 0.0
      %223 = vmatpush.msra.mxu0 0.0
      %224 = vmatpush.msra.mxu0 0.0
      %225 = vmatpush.msra.mxu0 0.0
      %226 = vmatpush.msra.mxu0 0.0
      %227 = vmatpush.msra.mxu0 0.0
      %228 = vmatpush.msra.mxu0 0.0
      %229 = vmatpush.msra.mxu0 0.0
      %230 = vmatpush.msra.mxu0 0.0
      %231 = vmatpush.msra.mxu0 0.0
      %232 = vmatpush.msra.mxu0 0.0
      %233 = vmatpush.msra.mxu0 0.0
      %234 = vmatpush.msra.mxu0 %v217
      %235 = vmatmul.f32.gmra.mxu0 %v213
      %v236 = vpop.f32.mrf.mxu0
      %v237 = vadd.f32 0.0, %v236
      %238 = vdwg.mxu0
      %v239 = vxor.u32 %v237, 2147483648
      %v240 = vmul.f32 %v239, 1.442695
      %v241 = vpow.pop %v240
      %v242 = vadd.f32 %v241, 1.0
      %v243 = vrcp.pop %v242
      %v244 = vmul.f32 %v242, %v243
      %v245 = vsub.f32 1.0, %v244
      %v246 = vmul.f32 %v243, %v245
      %v247 = vadd.f32 %v243, %v246
      %vm248 = vweird.f32 %v242
      %vm249 = vweird.f32 %v243
      %vm250 = vmor %vm248, %vm249
      %v251 = vsel %vm250, %v243, %v247
      %v252 = vand.u32 2147483647, %v242
      %vm253 = vcmp.eq.f32.partialorder %v252, 8.507059e+37
      %v254 = vand.u32 %v242, 2147483648
      %v255 = vor.u32 1.1754944e-38, %v254
      %v256 = vsel %vm253, %v255, %v251
      %v257 = vmul.f32 1.0, %v256
      %258 = vst.msk [vmem:[#allocation7] sm:$0x3] %vm113, %v257
    $region25: #{tpu_custom_call.1} parent=1 // pred_fallthru
      _
    // Predicated region
    $region26: #{tpu_custom_call.1} parent=1 // pred_check
      _
    $region27: #{tpu_custom_call.1} parent=1 // pred_check_branch
      %260 = sbr.rel (0) target = $region29
    $region28: #{tpu_custom_call.1} parent=1 // pred_region
      %262 = vsyncadd [#allocation6], 0
      %s264 = sshll.u32 [#allocation7], 4
      %s265 = int_to_ptr.vmem [resolvable:$true] %s264
      %s266 = sshll.u32 %s3, 4
      %s267 = int_to_ptr.hbm [resolvable:$true] %s266
      %269 = dma.vmem_to_hbm [thread:$0]  %s265, 32, %s267, [#allocation6]
    $region29: #{tpu_custom_call.1} parent=1 // pred_fallthru
      _
    // Predicated region
    $region30: #{tpu_custom_call.1} parent=1 // pred_check
      _
    $region31: #{tpu_custom_call.1} parent=1 // pred_check_branch
      %271 = sbr.rel (0) target = $region33
    $region32: #{tpu_custom_call.1} parent=1 // pred_region
      %273 = dma.done [#allocation6], 32
    $region33: #{tpu_custom_call.1} parent=1 // pred_fallthru
      _
    %274 = vsyncpa [#allocation5], 1
    %275 = vsyncpa [#allocation6], 1

</llo_original>
